<compile_context>
chip_gen: v7x
topology: tpu7x:2x2x1
jax: 0.10.0
libtpu: 0.0.40
codegen_flags: <defaults>
</compile_context>

<pallas_src>
import jax
import jax.numpy as jnp
from jax.experimental import pallas as pl
from jax.experimental.pallas import tpu as pltpu


def _vmem_budget():
    """(per-step VMEM budget, max time tile, vmem capacity) — generation aware."""
    cap = None
    try:
        info = pltpu.get_tpu_info()
        cap = getattr(info, "vmem_capacity_bytes", None)
    except Exception:
        cap = None
    if cap is None:
        cap = 64 << 20                     # conservative: v7x has 64 MiB per TC
    if cap >= (96 << 20):                  # 128 MiB parts (v5e / v6e)
        return 48 << 20, 2048, cap
    return 24 << 20, 1024, cap             # v7x: half the VMEM per TC


def _pick_t_tile(T, C_in, C_out, K, itemsize, max_tile, budget):
    """Largest multiple-of-128 time tile <= max_tile that divides T and fits the
    VMEM budget; falls back to the full sequence (one tile) for awkward T."""
    pad_left = (K - 1) // 2
    pad_right = (K - 1) - pad_left
    Kh = K - 1
    off_c = 128 if pad_left > 0 else 0

    def est(tt):
        t_win = off_c + tt + pad_right
        b = (2 * C_in * tt + 2 * C_out * tt + 2 * C_in * max(Kh, 1)) * itemsize
        if Kh > 0:
            b += C_in * t_win * itemsize                       # window scratch
        b += (C_in * K + C_out * C_in + C_out) * 4             # weights / bias
        b += (C_in + C_out) * tt * 4                           # live f32 values
        return b

    best = None
    tt = 128
    while tt <= min(T, max_tile):
        if T % tt == 0 and est(tt) <= budget:
            best = tt
        tt += 128
    return best if best is not None else T


def _build_halo(x, nt, t_tile, pad_left, pad_right):
    """Tiny (N, nt, C_in, K-1) array: per-tile left/right halo columns, with
    zeros at the sequence boundaries.  Negligible HBM traffic (K-1 cols/tile)."""
    N, C_in, _ = x.shape
    xr = x.reshape(N, C_in, nt, t_tile)
    parts = []
    if pad_left > 0:
        tail = xr[:, :, :, t_tile - pad_left:]                  # (N, C, nt, pl)
        left = jnp.concatenate(
            [jnp.zeros_like(tail[:, :, :1]), tail[:, :, :nt - 1]], axis=2)
        parts.append(left)
    if pad_right > 0:
        head = xr[:, :, :, :pad_right]                          # (N, C, nt, pr)
        right = jnp.concatenate(
            [head[:, :, 1:], jnp.zeros_like(head[:, :, :1])], axis=2)
        parts.append(right)
    halo = jnp.concatenate(parts, axis=3) if len(parts) > 1 else parts[0]
    return jnp.transpose(halo, (0, 2, 1, 3))                    # (N, nt, C, K-1)


def make_tcs_conv(in_channels, out_channels, kernel_size, seq_len, max_t_tile=None):
    """Returns (tcs_conv(x, wdw, bdw, wpw, bpw) -> out, pad_left, pad_right)."""
    K = kernel_size
    T = seq_len
    C_in = in_channels
    C_out = out_channels
    # torch.nn.Conv1d padding='same' (stride=1, dilation=1): extra pad on the right.
    pad_left = (K - 1) // 2
    pad_right = (K - 1) - pad_left
    Kh = K - 1
    have_halo = Kh > 0

    budget, gen_max_tile, vmem_cap = _vmem_budget()
    max_tile = gen_max_tile if max_t_tile is None else max_t_tile

    def tcs_conv(x, wdw, bdw, wpw, bpw):
        N = x.shape[0]
        assert x.shape == (N, C_in, T), x.shape
        itemsize = jnp.dtype(x.dtype).itemsize
        t_tile = _pick_t_tile(T, C_in, C_out, K, itemsize, max_tile, budget)
        nt = T // t_tile

        # Window scratch layout: [128-lane pad | center | right halo] so the big
        # center store is lane-aligned (unmasked vst).
        off_c = 128 if pad_left > 0 else 0
        t_win = off_c + t_tile + pad_right

        # Fold the depthwise bias through the (linear) pointwise conv, in f32.
        b_fused = (jnp.dot(wpw.astype(jnp.float32),
                           bdw.astype(jnp.float32).reshape(C_in, 1))
                   + bpw.astype(jnp.float32).reshape(C_out, 1))     # (C_out, 1)

        args = [x]
        in_specs = [pl.BlockSpec((1, C_in, t_tile), lambda n, t: (n, 0, t))]
        if have_halo:
            halo = _build_halo(x, nt, t_tile, pad_left, pad_right)  # (N,nt,C,K-1)
            args.append(halo)
            in_specs.append(pl.BlockSpec((1, 1, C_in, Kh), lambda n, t: (n, t, 0, 0)))
        args += [wdw, wpw, b_fused]
        in_specs += [
            pl.BlockSpec((C_in, K), lambda n, t: (0, 0)),
            pl.BlockSpec((C_out, C_in), lambda n, t: (0, 0)),
            pl.BlockSpec((C_out, 1), lambda n, t: (0, 0)),
        ]
        scratch_shapes = [pltpu.VMEM((C_in, t_win), x.dtype)] if have_halo else []

        def tcs_kernel(*refs):
            if have_halo:
                x_ref, h_ref, wdw_ref, wpw_ref, bf_ref, out_ref, xwin_ref = refs
            else:
                x_ref, wdw_ref, wpw_ref, bf_ref, out_ref = refs

            center = x_ref[0]                                    # (C_in, t_tile)

            if have_halo:
                # Lane-aligned center store (unmasked); halos are tiny masked stores.
                xwin_ref[:, off_c:off_c + t_tile] = center
                if pad_left > 0:
                    xwin_ref[:, off_c - pad_left:off_c] = h_ref[0, 0, :, :pad_left]
                if pad_right > 0:
                    xwin_ref[:, off_c + t_tile:off_c + t_tile + pad_right] = (
                        h_ref[0, 0, :, pad_left:])

            # Depthwise conv: K unrolled taps (VPU MACs); the aligned tap reuses
            # the already-loaded center value, the rest are static slightly
            # misaligned reads of the window scratch (fine for small K).
            # TODO(synk): for QuartzNet-scale K (33..87) restructure the taps as a
            # banded/im2col matmul on the MXU (or chunked lax.fori_loop over channel
            # blocks) instead of a full VALU unroll.
            y = jnp.zeros((C_in, t_tile), dtype=jnp.float32)
            for k in range(K):
                if k == pad_left:
                    tap = center.astype(jnp.float32)
                else:
                    s = off_c - pad_left + k
                    tap = xwin_ref[:, s:s + t_tile].astype(jnp.float32)
                y = y + wdw_ref[:, k:k + 1].astype(jnp.float32) * tap

            # Pointwise 1x1 conv: one MXU matmul over channels, f32 accumulation.
            # TODO(synk): at production widths (C_in/C_out >= 128) cast y and wpw to
            # bfloat16 on v6e/v7x (keep preferred_element_type=f32), and add a C_out
            # grid axis for C_out > ~256 to bound the f32 output live set.
            out = jnp.dot(wpw_ref[...].astype(jnp.float32), y,
                          preferred_element_type=jnp.float32)
            out_ref[0] = (out + bf_ref[...]).astype(out_ref.dtype)

        grid_spec = pltpu.PrefetchScalarGridSpec(
            num_scalar_prefetch=0,
            grid=(N, nt),
            in_specs=in_specs,
            out_specs=pl.BlockSpec((1, C_out, t_tile), lambda n, t: (n, 0, t)),
            scratch_shapes=scratch_shapes,
        )

        # Per-step VMEM estimate (double-buffered tiles + scratch + live f32).
        est_bytes = ((2 * C_in * t_tile + 2 * C_out * t_tile
                      + 2 * C_in * max(Kh, 1)) * itemsize
                     + (C_in * t_win * itemsize if have_halo else 0)
                     + (C_in * K + C_out * C_in + C_out) * 4
                     + (C_in + C_out) * t_tile * 4)
        # Always set the scoped-VMEM limit (v5e's default is only 16 MiB).
        vmem_limit = int(min(max(2 * est_bytes, 16 << 20), int(0.9 * vmem_cap)))

        flops = 2 * N * T * C_in * (K + C_out)
        bytes_accessed = int((N * C_in * T + N * nt * C_in * Kh + N * C_out * T)
                             * itemsize
                             + (C_in * K + C_out * C_in + C_out) * 4)
        cost = pl.CostEstimate(flops=int(flops), transcendentals=0,
                               bytes_accessed=bytes_accessed)

        return pl.pallas_call(
            tcs_kernel,
            out_shape=jax.ShapeDtypeStruct((N, C_out, T), x.dtype),
            grid_spec=grid_spec,
            compiler_params=pltpu.CompilerParams(
                # Both axes independent; on v7x megacore pick t_tile so each TC
                # keeps >= ~4 pipeline steps (N*nt split across 2 cores).
                dimension_semantics=("parallel", "parallel"),
                vmem_limit_bytes=vmem_limit),
            cost_estimate=cost,
        )(*args)

    return tcs_conv, pad_left, pad_right


def tcs_conv_reference(x, wdw, bdw, wpw, bpw, pad_left, pad_right):
    """Pure-JAX reference matching PyTorch TCSConv semantics."""
    N, C_in, T = x.shape
    K = wdw.shape[1]
    xpad = jnp.pad(x, ((0, 0), (0, 0), (pad_left, pad_right)))
    y = jnp.zeros((N, C_in, T), dtype=jnp.float32)
    for k in range(K):
        y = y + (wdw[None, :, k:k + 1].astype(jnp.float32)
                 * xpad[:, :, k:k + T].astype(jnp.float32))
    y = y + bdw[None, :, None].astype(jnp.float32)
    out = jnp.einsum("oc,nct->not", wpw.astype(jnp.float32), y,
                     precision=jax.lax.Precision.HIGHEST)
    out = out + bpw[None, :, None].astype(jnp.float32)
    return out.astype(x.dtype)


if __name__ == "__main__":
    # Small shapes consistent with the module's forward: x is (N, C_in, T).
    # T is a multiple of 128; max_t_tile=512 forces 2 lane-dense time tiles so
    # the inter-tile halo path (BlockSpec-delivered halos) is exercised.
    N, C_in, C_out, T, K = 2, 8, 16, 1024, 5

    key = jax.random.PRNGKey(0)
    k0, k1, k2, k3, k4 = jax.random.split(key, 5)
    x = jax.random.normal(k0, (N, C_in, T), dtype=jnp.float32)
    # torch param shapes: depthwise weight (C_in,1,K)->(C_in,K), bias (C_in,);
    #                     pointwise weight (C_out,C_in,1)->(C_out,C_in), bias (C_out,)
    wdw = jax.random.normal(k1, (C_in, K), dtype=jnp.float32) * 0.1
    bdw = jax.random.normal(k2, (C_in,), dtype=jnp.float32) * 0.1
    wpw = jax.random.normal(k3, (C_out, C_in), dtype=jnp.float32) * 0.1
    bpw = jax.random.normal(k4, (C_out,), dtype=jnp.float32) * 0.1

    tcs_conv, pad_l, pad_r = make_tcs_conv(C_in, C_out, K, T, max_t_tile=512)
    out = tcs_conv(x, wdw, bdw, wpw, bpw)
    jax.block_until_ready(out)

    ref = tcs_conv_reference(x, wdw, bdw, wpw, bpw, pad_l, pad_r)
    assert out.shape == (N, C_out, T), out.shape
    err = float(jnp.max(jnp.abs(out.astype(jnp.float32) - ref.astype(jnp.float32))))
    assert err < 1e-3, f"mismatch vs reference: max abs err {err}"

    print("KERNEL_OK")
</pallas_src>

<mosaic_0001>
module attributes {stable_mosaic.version = 11 : i64} {
  func.func @tcs_kernel(%arg0: i32, %arg1: i32, %arg2: memref<1x8x512xf32, #tpu.memory_space<vmem>>, %arg3: memref<1x1x8x4xf32, #tpu.memory_space<vmem>>, %arg4: memref<8x5xf32, #tpu.memory_space<vmem>>, %arg5: memref<16x8xf32, #tpu.memory_space<vmem>>, %arg6: memref<16x1xf32, #tpu.memory_space<vmem>>, %arg7: memref<1x16x512xf32, #tpu.memory_space<vmem>>, %arg8: memref<8x642xf32, #tpu.memory_space<vmem>>) attributes {dimension_semantics = [#tpu.dimension_semantics<parallel>, #tpu.dimension_semantics<parallel>], iteration_bounds = array<i64: 2, 2>, scalar_prefetch = 0 : i64, scratch_operands = 1 : i64, tpu.core_type = #tpu.core_type<tc>, window_params = [{transform_indices = @transform_0, window_bounds = array<i64: 1, 8, 512>}, {transform_indices = @transform_1, window_bounds = array<i64: 1, 1, 8, 4>}, {pipeline_mode = #tpu.pipeline_mode<synchronous>, transform_indices = @transform_2, window_bounds = array<i64: 8, 5>}, {pipeline_mode = #tpu.pipeline_mode<synchronous>, transform_indices = @transform_3, window_bounds = array<i64: 16, 8>}, {pipeline_mode = #tpu.pipeline_mode<synchronous>, transform_indices = @transform_4, window_bounds = array<i64: 16, 1>}, {transform_indices = @transform_5, window_bounds = array<i64: 1, 16, 512>}]} {
    %c0 = arith.constant 0 : index
    %c0_0 = arith.constant 0 : index
    %c0_1 = arith.constant 0 : index
    %0 = vector.load %arg2[%c0, %c0_0, %c0_1] : memref<1x8x512xf32, #tpu.memory_space<vmem>>, vector<1x8x512xf32>
    %1 = vector.shape_cast %0 : vector<1x8x512xf32> to vector<8x512xf32>
    %c0_2 = arith.constant 0 : index
    %c128 = arith.constant 128 : index
    %2 = vector.load %arg8[%c0_2, %c128] : memref<8x642xf32, #tpu.memory_space<vmem>>, vector<8x512xf32>
    tpu.vector_store %arg8[%c0_2, %c128], %1 {strides = array<i32>} : memref<8x642xf32, #tpu.memory_space<vmem>>, vector<8x512xf32>,
    %c0_3 = arith.constant 0 : index
    %c0_4 = arith.constant 0 : index
    %c0_5 = arith.constant 0 : index
    %c0_6 = arith.constant 0 : index
    %3 = vector.load %arg3[%c0_3, %c0_4, %c0_5, %c0_6] : memref<1x1x8x4xf32, #tpu.memory_space<vmem>>, vector<1x1x8x2xf32>
    %4 = vector.shape_cast %3 : vector<1x1x8x2xf32> to vector<8x2xf32>
    %c0_7 = arith.constant 0 : index
    %c126 = arith.constant 126 : index
    %5 = vector.load %arg8[%c0_7, %c126] : memref<8x642xf32, #tpu.memory_space<vmem>>, vector<8x2xf32>
    tpu.vector_store %arg8[%c0_7, %c126], %4 {strides = array<i32>} : memref<8x642xf32, #tpu.memory_space<vmem>>, vector<8x2xf32>,
    %c0_8 = arith.constant 0 : index
    %c0_9 = arith.constant 0 : index
    %c0_10 = arith.constant 0 : index
    %c2 = arith.constant 2 : index
    %6 = vector.load %arg3[%c0_8, %c0_9, %c0_10, %c2] : memref<1x1x8x4xf32, #tpu.memory_space<vmem>>, vector<1x1x8x2xf32>
    %7 = vector.shape_cast %6 : vector<1x1x8x2xf32> to vector<8x2xf32>
    %c0_11 = arith.constant 0 : index
    %c640 = arith.constant 640 : index
    %8 = vector.load %arg8[%c0_11, %c640] : memref<8x642xf32, #tpu.memory_space<vmem>>, vector<8x2xf32>
    tpu.vector_store %arg8[%c0_11, %c640], %7 {strides = array<i32>} : memref<8x642xf32, #tpu.memory_space<vmem>>, vector<8x2xf32>,
    %cst = arith.constant 0.000000e+00 : f32
    %9 = vector.broadcast %cst : f32 to vector<8x512xf32>
    %c0_12 = arith.constant 0 : index
    %c126_13 = arith.constant 126 : index
    %10 = vector.load %arg8[%c0_12, %c126_13] : memref<8x642xf32, #tpu.memory_space<vmem>>, vector<8x512xf32>
    %c0_14 = arith.constant 0 : index
    %c0_15 = arith.constant 0 : index
    %11 = vector.load %arg4[%c0_14, %c0_15] : memref<8x5xf32, #tpu.memory_space<vmem>>, vector<8x1xf32>
    %12 = vector.broadcast %11 : vector<8x1xf32> to vector<8x512xf32>
    %13 = arith.mulf %12, %10 : vector<8x512xf32>
    %14 = arith.addf %9, %13 : vector<8x512xf32>
    %c0_16 = arith.constant 0 : index
    %c127 = arith.constant 127 : index
    %15 = vector.load %arg8[%c0_16, %c127] : memref<8x642xf32, #tpu.memory_space<vmem>>, vector<8x512xf32>
    %c0_17 = arith.constant 0 : index
    %c1 = arith.constant 1 : index
    %16 = vector.load %arg4[%c0_17, %c1] : memref<8x5xf32, #tpu.memory_space<vmem>>, vector<8x1xf32>
    %17 = vector.broadcast %16 : vector<8x1xf32> to vector<8x512xf32>
    %18 = arith.mulf %17, %15 : vector<8x512xf32>
    %19 = arith.addf %14, %18 : vector<8x512xf32>
    %c0_18 = arith.constant 0 : index
    %c2_19 = arith.constant 2 : index
    %20 = vector.load %arg4[%c0_18, %c2_19] : memref<8x5xf32, #tpu.memory_space<vmem>>, vector<8x1xf32>
    %21 = vector.broadcast %20 : vector<8x1xf32> to vector<8x512xf32>
    %22 = arith.mulf %21, %1 : vector<8x512xf32>
    %23 = arith.addf %19, %22 : vector<8x512xf32>
    %c0_20 = arith.constant 0 : index
    %c129 = arith.constant 129 : index
    %24 = vector.load %arg8[%c0_20, %c129] : memref<8x642xf32, #tpu.memory_space<vmem>>, vector<8x512xf32>
    %c0_21 = arith.constant 0 : index
    %c3 = arith.constant 3 : index
    %25 = vector.load %arg4[%c0_21, %c3] : memref<8x5xf32, #tpu.memory_space<vmem>>, vector<8x1xf32>
    %26 = vector.broadcast %25 : vector<8x1xf32> to vector<8x512xf32>
    %27 = arith.mulf %26, %24 : vector<8x512xf32>
    %28 = arith.addf %23, %27 : vector<8x512xf32>
    %c0_22 = arith.constant 0 : index
    %c130 = arith.constant 130 : index
    %29 = vector.load %arg8[%c0_22, %c130] : memref<8x642xf32, #tpu.memory_space<vmem>>, vector<8x512xf32>
    %c0_23 = arith.constant 0 : index
    %c4 = arith.constant 4 : index
    %30 = vector.load %arg4[%c0_23, %c4] : memref<8x5xf32, #tpu.memory_space<vmem>>, vector<8x1xf32>
    %31 = vector.broadcast %30 : vector<8x1xf32> to vector<8x512xf32>
    %32 = arith.mulf %31, %29 : vector<8x512xf32>
    %33 = arith.addf %28, %32 : vector<8x512xf32>
    %c0_24 = arith.constant 0 : index
    %c0_25 = arith.constant 0 : index
    %34 = vector.load %arg5[%c0_24, %c0_25] : memref<16x8xf32, #tpu.memory_space<vmem>>, vector<16x8xf32>
    %cst_26 = arith.constant dense<0.000000e+00> : vector<16x512xf32>
    %35 = tpu.matmul %34, %33, %cst_26 {dimension_numbers = #tpu.dot_dimension_numbers<[1], [0], [0], [1], [0, 0, 1, 1], [], []>} : vector<16x8xf32>, vector<8x512xf32>, vector<16x512xf32> -> vector<16x512xf32>
    %c0_27 = arith.constant 0 : index
    %c0_28 = arith.constant 0 : index
    %36 = vector.load %arg6[%c0_27, %c0_28] : memref<16x1xf32, #tpu.memory_space<vmem>>, vector<16x1xf32>
    %37 = vector.broadcast %36 : vector<16x1xf32> to vector<16x512xf32>
    %38 = arith.addf %35, %37 : vector<16x512xf32>
    %c0_29 = arith.constant 0 : index
    %c0_30 = arith.constant 0 : index
    %c0_31 = arith.constant 0 : index
    %39 = vector.load %arg7[%c0_29, %c0_30, %c0_31] : memref<1x16x512xf32, #tpu.memory_space<vmem>>, vector<1x16x512xf32>
    %40 = vector.shape_cast %39 : vector<1x16x512xf32> to vector<16x512xf32>
    %41 = vector.shape_cast %38 : vector<16x512xf32> to vector<1x16x512xf32>
    tpu.vector_store %arg7[%c0_29, %c0_30, %c0_31], %41 {strides = array<i32>} : memref<1x16x512xf32, #tpu.memory_space<vmem>>, vector<1x16x512xf32>,
    return
  }
  func.func @transform_0(%arg0: i32, %arg1: i32) -> (i32, i32, i32) {
    %c0_i32 = arith.constant 0 : i32
    %c0_i32_0 = arith.constant 0 : i32
    return %arg0, %c0_i32, %arg1 : i32, i32, i32
  }
  func.func @transform_1(%arg0: i32, %arg1: i32) -> (i32, i32, i32, i32) {
    %c0_i32 = arith.constant 0 : i32
    %c0_i32_0 = arith.constant 0 : i32
    %c0_i32_1 = arith.constant 0 : i32
    return %arg0, %arg1, %c0_i32, %c0_i32_0 : i32, i32, i32, i32
  }
  func.func @transform_2(%arg0: i32, %arg1: i32) -> (i32, i32) {
    %c0_i32 = arith.constant 0 : i32
    %c0_i32_0 = arith.constant 0 : i32
    %c0_i32_1 = arith.constant 0 : i32
    return %c0_i32, %c0_i32_0 : i32, i32
  }
  func.func @transform_3(%arg0: i32, %arg1: i32) -> (i32, i32) {
    %c0_i32 = arith.constant 0 : i32
    %c0_i32_0 = arith.constant 0 : i32
    %c0_i32_1 = arith.constant 0 : i32
    return %c0_i32, %c0_i32_0 : i32, i32
  }
  func.func @transform_4(%arg0: i32, %arg1: i32) -> (i32, i32) {
    %c0_i32 = arith.constant 0 : i32
    %c0_i32_0 = arith.constant 0 : i32
    %c0_i32_1 = arith.constant 0 : i32
    return %c0_i32, %c0_i32_0 : i32, i32
  }
  func.func @transform_5(%arg0: i32, %arg1: i32) -> (i32, i32, i32) {
    %c0_i32 = arith.constant 0 : i32
    %c0_i32_0 = arith.constant 0 : i32
    return %arg0, %c0_i32, %arg1 : i32, i32, i32
  }
}

</mosaic_0001>

<llo_original>
// kernel: tpu_custom_call.1
$region0: #{tpu_custom_call.1}
  #allocation0 [shape = 'u32[]', space=smem, size = 0x4, offset = 0x4, fixed_abs, tag = 'smem constant byte address 0x4 - core index']
  #allocation1 [shape = 'u32[144,128]{1,0:T(1,128)}', space=vmem, size = 0x12000, scoped, tag = 'internal scratch']
  #allocation2 [shape = 'f32[8,642]{1,0:T(8,128)}', space=vmem, size = 0x6000, scoped, tag = 'scratch operand']
  %s0 = inlined_call_operand.hbm [shape: f32[2,8,1024], index: 0, kind: input, shape index: {}]
  %s1 = inlined_call_operand.vmem [shape: f32[2,2,8,4], index: 1, kind: input, shape index: {}]
  %s2 = inlined_call_operand.vmem [shape: f32[8,5], index: 2, kind: input, shape index: {}]
  %s3 = inlined_call_operand.vmem [shape: f32[16,8], index: 3, kind: input, shape index: {}]
  %s4 = inlined_call_operand.vmem [shape: f32[16,1], index: 4, kind: input, shape index: {}]
  %s5 = inlined_call_operand.hbm [shape: f32[2,16,1024], index: 5, kind: output, shape index: {}]
  %s6 = sld [smem:[#allocation0]]
  $region57: #{tpu_custom_call.1} parent=0
    _
  %s8 = ssub.s32 1, %s6
  %s9 = scalar_select 0, %s8, %s6
  $region1: #{tpu_custom_call.1} parent=0
    #allocation3 [shape = 'u8[32768]{0}', space=vmem, size = 0x8000, scoped, tag = 'input window, operand 0']
    #allocation4 [shape = 's32[2]{0}', space=sflag, size = 0x8, scoped, tag = 'scoped memory for tpu_custom_call.1']
    #allocation5 [shape = 's32[2]{0}', space=sflag, size = 0x8, scoped, tag = 'scoped memory for tpu_custom_call.1']
    #allocation6 [shape = 'u8[65536]{0}', space=vmem, size = 0x10000, scoped, tag = 'output window, operand 0']
    %10 = vsyncpa [#allocation4], 0
    %s11 = scalar_lea.sflag [#allocation4], 1
    %12 = vsyncpa %s11, 0
    %13 = vsyncpa [#allocation5], 0
    %s14 = scalar_lea.sflag [#allocation5], 1
    %15 = vsyncpa %s14, 0
    loop: start=0, step=1, limit=6
    $region2: #{tpu_custom_call.1} parent=1 // loop_pre_header
      _
    $region3: #{tpu_custom_call.1} parent=1 // loop_header
      %s17 = sphi 0, %s21
      %p18 = scmp.ge.s32.totalorder %s17, 6
      %s24 = sphi 0, %s36
      %s25 = sphi 0, %s32
      %s26 = sphi 0, %s24
      %s27 = sphi 0, %s25
      %s28 = sphi 0, %s26
      %s29 = sphi 0, %s27
      %s41 = sphi 0, %s43
      %s44 = sphi 0, %s41
      %s45 = sphi 0, %s44
      %s61 = sphi 0, %s45
      %s69 = sphi 0, %s71
      %s72 = sphi 0, %s69
      %s73 = sphi 0, %s72
      %s89 = sphi 0, %s73
      %s93 = sphi 0, %s93
      %s95 = sphi 0, %s93
      %s96 = sphi 0, %s95
      %s110 = sphi 0, %s96
      %s114 = sphi 0, %s114
      %s116 = sphi 0, %s114
      %s117 = sphi 0, %s116
      %s131 = sphi 0, %s117
      %s135 = sphi 0, %s135
      %s137 = sphi 0, %s135
      %s138 = sphi 0, %s137
      %s152 = sphi 0, %s138
      %s160 = sphi 0, %s162
      %s163 = sphi 0, %s160
      %s164 = sphi 0, %s163
      %s180 = sphi 0, %s164
    $region4: #{tpu_custom_call.1} parent=1 // loop_header_branch
      %20 = sbr.rel (%p18) target = $region8
    $region5: #{tpu_custom_call.1} parent=1 // loop_body
      %s22 = ssub.s32 %s17, 1
      %s23 = ssub.s32 %s17, 2
      %s30 = sadd.s32 1, %s25
      %p31 = scmp.ge.s32.totalorder %s30, 2
      %s32 = scalar_select %p31, 0, %s30
      %s33 = sadd.s32 1, %s24
      %s34 = scalar_select %p31, %s33, %s24
      %p35 = scmp.ge.s32.totalorder %s34, 2
      %s36 = scalar_select %p35, 0, %s34
      %s37 = ssub.s32 %s24, %s36
      %s38 = ssub.s32 %s25, %s32
      %s39 = sor.u32 %s37, %s38
      %p40 = scmp.eq.s32.totalorder %s39, 0
      %s42 = sadd.s32 %s41, 1
      %s43 = scalar_select %p40, %s41, %s42
      %p46 = pneg %p40
      %p47 = scmp.eq.s32.totalorder %s17, 3
      %p48 = por %p46, %p47
      %p49 = scmp.ne.s32.totalorder %s41, %s44
      %p50 = scmp.eq.s32.totalorder %s17, 0
      %p51 = por %p49, %p50
      %p52 = scmp.ne.s32.totalorder %s41, %s44
      %p53 = scmp.eq.s32.totalorder %s22, 3
      %p54 = por %p52, %p53
      %p55 = scmp.ne.s32.totalorder %s44, %s45
      %p56 = scmp.eq.s32.totalorder %s22, 0
      %p57 = por %p55, %p56
      %p58 = scmp.ne.s32.totalorder %s44, %s45
      %p59 = scmp.eq.s32.totalorder %s23, 3
      %p60 = por %p58, %p59
      %p62 = scmp.ne.s32.totalorder %s45, %s61
      %p63 = scmp.eq.s32.totalorder %s23, 0
      %p64 = por %p62, %p63
      %s65 = ssub.s32 %s24, %s36
      %s66 = ssub.s32 %s25, %s32
      %s67 = sor.u32 %s65, %s66
      %p68 = scmp.eq.s32.totalorder %s67, 0
      %s70 = sadd.s32 %s69, 1
      %s71 = scalar_select %p68, %s69, %s70
      %p74 = pneg %p68
      %p75 = scmp.eq.s32.totalorder %s17, 3
      %p76 = por %p74, %p75
      %p77 = scmp.ne.s32.totalorder %s69, %s72
      %p78 = scmp.eq.s32.totalorder %s17, 0
      %p79 = por %p77, %p78
      %p80 = scmp.ne.s32.totalorder %s69, %s72
      %p81 = scmp.eq.s32.totalorder %s22, 3
      %p82 = por %p80, %p81
      %p83 = scmp.ne.s32.totalorder %s72, %s73
      %p84 = scmp.eq.s32.totalorder %s22, 0
      %p85 = por %p83, %p84
      %p86 = scmp.ne.s32.totalorder %s72, %s73
      %p87 = scmp.eq.s32.totalorder %s23, 3
      %p88 = por %p86, %p87
      %p90 = scmp.ne.s32.totalorder %s73, %s89
      %p91 = scmp.eq.s32.totalorder %s23, 0
      %p92 = por %p90, %p91
      %s94 = sadd.s32 %s93, 1
      %p97 = scmp.eq.s32.totalorder %s17, 3
      %p98 = scmp.ne.s32.totalorder %s93, %s95
      %p99 = scmp.eq.s32.totalorder %s17, 0
      %p100 = por %p98, %p99
      %p101 = scmp.ne.s32.totalorder %s93, %s95
      %p102 = scmp.eq.s32.totalorder %s22, 3
      %p103 = por %p101, %p102
      %p104 = scmp.ne.s32.totalorder %s95, %s96
      %p105 = scmp.eq.s32.totalorder %s22, 0
      %p106 = por %p104, %p105
      %p107 = scmp.ne.s32.totalorder %s95, %s96
      %p108 = scmp.eq.s32.totalorder %s23, 3
      %p109 = por %p107, %p108
      %p111 = scmp.ne.s32.totalorder %s96, %s110
      %p112 = scmp.eq.s32.totalorder %s23, 0
      %p113 = por %p111, %p112
      %s115 = sadd.s32 %s114, 1
      %p118 = scmp.eq.s32.totalorder %s17, 3
      %p119 = scmp.ne.s32.totalorder %s114, %s116
      %p120 = scmp.eq.s32.totalorder %s17, 0
      %p121 = por %p119, %p120
      %p122 = scmp.ne.s32.totalorder %s114, %s116
      %p123 = scmp.eq.s32.totalorder %s22, 3
      %p124 = por %p122, %p123
      %p125 = scmp.ne.s32.totalorder %s116, %s117
      %p126 = scmp.eq.s32.totalorder %s22, 0
      %p127 = por %p125, %p126
      %p128 = scmp.ne.s32.totalorder %s116, %s117
      %p129 = scmp.eq.s32.totalorder %s23, 3
      %p130 = por %p128, %p129
      %p132 = scmp.ne.s32.totalorder %s117, %s131
      %p133 = scmp.eq.s32.totalorder %s23, 0
      %p134 = por %p132, %p133
      %s136 = sadd.s32 %s135, 1
      %p139 = scmp.eq.s32.totalorder %s17, 3
      %p140 = scmp.ne.s32.totalorder %s135, %s137
      %p141 = scmp.eq.s32.totalorder %s17, 0
      %p142 = por %p140, %p141
      %p143 = scmp.ne.s32.totalorder %s135, %s137
      %p144 = scmp.eq.s32.totalorder %s22, 3
      %p145 = por %p143, %p144
      %p146 = scmp.ne.s32.totalorder %s137, %s138
      %p147 = scmp.eq.s32.totalorder %s22, 0
      %p148 = por %p146, %p147
      %p149 = scmp.ne.s32.totalorder %s137, %s138
      %p150 = scmp.eq.s32.totalorder %s23, 3
      %p151 = por %p149, %p150
      %p153 = scmp.ne.s32.totalorder %s138, %s152
      %p154 = scmp.eq.s32.totalorder %s23, 0
      %p155 = por %p153, %p154
      %s156 = ssub.s32 %s24, %s36
      %s157 = ssub.s32 %s25, %s32
      %s158 = sor.u32 %s156, %s157
      %p159 = scmp.eq.s32.totalorder %s158, 0
      %s161 = sadd.s32 %s160, 1
      %s162 = scalar_select %p159, %s160, %s161
      %p165 = pneg %p159
      %p166 = scmp.eq.s32.totalorder %s17, 3
      %p167 = por %p165, %p166
      %p168 = scmp.ne.s32.totalorder %s160, %s163
      %p169 = scmp.eq.s32.totalorder %s17, 0
      %p170 = por %p168, %p169
      %p171 = scmp.ne.s32.totalorder %s160, %s163
      %p172 = scmp.eq.s32.totalorder %s22, 3
      %p173 = por %p171, %p172
      %p174 = scmp.ne.s32.totalorder %s163, %s164
      %p175 = scmp.eq.s32.totalorder %s22, 0
      %p176 = por %p174, %p175
      %p177 = scmp.ne.s32.totalorder %s163, %s164
      %p178 = scmp.eq.s32.totalorder %s23, 3
      %p179 = por %p177, %p178
      %p181 = scmp.ne.s32.totalorder %s164, %s180
      %p182 = scmp.eq.s32.totalorder %s23, 0
      %p183 = por %p181, %p182
      %p184 = scmp.le.s32.totalorder 1, %s17
      %p185 = scmp.lt.s32.totalorder %s17, 5
      %p186 = pnand %p184, %p185
      %p187 = pneg %p186
      // Predicated region
      $region9: #{tpu_custom_call.1} parent=5 // pred_check
        _
      $region10: #{tpu_custom_call.1} parent=5 // pred_check_branch
        %189 = sbr.rel (%p186) target = $region12
      $region11: #{tpu_custom_call.1} parent=5 // pred_region
        %s190 = ssub.s32 %s17, 1
        // Predicated region
        $region13: #{tpu_custom_call.1} parent=11 // pred_check
          %p191 = pneg %p106
        $region14: #{tpu_custom_call.1} parent=11 // pred_check_branch
          %193 = sbr.rel (%p191) target = $region16
        $region15: #{tpu_custom_call.1} parent=11 // pred_region
          _
        $region16: #{tpu_custom_call.1} parent=11 // pred_fallthru
          _
        // Predicated region
        $region17: #{tpu_custom_call.1} parent=11 // pred_check
          %p194 = pneg %p127
        $region18: #{tpu_custom_call.1} parent=11 // pred_check_branch
          %196 = sbr.rel (%p194) target = $region20
        $region19: #{tpu_custom_call.1} parent=11 // pred_region
          _
        $region20: #{tpu_custom_call.1} parent=11 // pred_fallthru
          _
        // Predicated region
        $region21: #{tpu_custom_call.1} parent=11 // pred_check
          %p197 = pneg %p148
        $region22: #{tpu_custom_call.1} parent=11 // pred_check_branch
          %199 = sbr.rel (%p197) target = $region24
        $region23: #{tpu_custom_call.1} parent=11 // pred_region
          _
        $region24: #{tpu_custom_call.1} parent=11 // pred_fallthru
          _
      $region12: #{tpu_custom_call.1} parent=5 // pred_fallthru
        _
      %p200 = scmp.lt.s32.totalorder %s17, 4
      // Predicated region
      $region25: #{tpu_custom_call.1} parent=5 // pred_check
        %p201 = pneg %p200
      $region26: #{tpu_custom_call.1} parent=5 // pred_check_branch
        %203 = sbr.rel (%p201) target = $region28
      $region27: #{tpu_custom_call.1} parent=5 // pred_region
        // Predicated region
        $region29: #{tpu_custom_call.1} parent=27 // pred_check
          %p204 = pneg %p51
        $region30: #{tpu_custom_call.1} parent=27 // pred_check_branch
          %206 = sbr.rel (%p204) target = $region32
        $region31: #{tpu_custom_call.1} parent=27 // pred_region
          %s207 = sand.u32 %s41, 1
          %s208 = scalar_lea.sflag [#allocation4], %s207
          %s209 = sand.u32 %s41, 1
          %s210 = smul.addr %s209, 32
          %s211 = scalar_lea.vmem [#allocation3], %s210
          %s212 = smul.u32 4, %s25
          %s214 = ssub.s32 512, 512
          %215 = vsyncadd %s208, %s214
          %s216 = smul.addr %s24, 8
          %s217 = sadd.s32 %s212, %s216
          %s218 = smul.addr %s217, 128
          %s219 = scalar_lea.hbm %s0, %s218
          %s221 = sshll.u32 %s211, 4
          %s222 = int_to_ptr.vmem [resolvable:$true] %s221
          %224 = dma.hbm_to_vmem [thread:$0]  %s219, 512, %s222, %s208
        $region32: #{tpu_custom_call.1} parent=27 // pred_fallthru
          _
        // Predicated region
        $region33: #{tpu_custom_call.1} parent=27 // pred_check
          %p225 = pneg %p79
        $region34: #{tpu_custom_call.1} parent=27 // pred_check_branch
          %227 = sbr.rel (%p225) target = $region36
        $region35: #{tpu_custom_call.1} parent=27 // pred_region
          %p228 = scmp.lt.s32.totalorder %s24, 1
          %s229 = scalar_select %p228, %s24, 1
          %p230 = scmp.lt.s32.totalorder %s25, 1
          %s231 = scalar_select %p230, %s25, 1
          %s232 = smul.addr %s229, 2
          %s233 = sadd.s32 %s231, %s232
          %s234 = smul.addr %s233, 8
          %s235 = scalar_lea.vmem %s1, %s234
        $region36: #{tpu_custom_call.1} parent=27 // pred_fallthru
          _
      $region28: #{tpu_custom_call.1} parent=5 // pred_fallthru
        _
      %p236 = scmp.le.s32.totalorder 1, %s17
      %p237 = scmp.lt.s32.totalorder %s17, 5
      %p238 = pnand %p236, %p237
      %p239 = pneg %p238
      // Predicated region
      $region37: #{tpu_custom_call.1} parent=5 // pred_check
        _
      $region38: #{tpu_custom_call.1} parent=5 // pred_check_branch
        %241 = sbr.rel (%p238) target = $region40
      $region39: #{tpu_custom_call.1} parent=5 // pred_region
        %s242 = ssub.s32 %s17, 1
        %s243 = sand.u32 %s44, 1
        %s244 = scalar_lea.sflag [#allocation4], %s243
        %s245 = sand.u32 %s44, 1
        %s246 = smul.addr %s245, 32
        %s247 = scalar_lea.vmem [#allocation3], %s246
        // Predicated region
        $region41: #{tpu_custom_call.1} parent=39 // pred_check
          %p248 = pneg %p57
        $region42: #{tpu_custom_call.1} parent=39 // pred_check_branch
          %250 = sbr.rel (%p248) target = $region44
        $region43: #{tpu_custom_call.1} parent=39 // pred_region
          %251 = dma.done %s244, 512
        $region44: #{tpu_custom_call.1} parent=39 // pred_fallthru
          _
        %s252 = sand.u32 %s44, 1
        %s253 = scalar_lea.sflag [#allocation4], %s252
        %s254 = sand.u32 %s44, 1
        %s255 = smul.addr %s254, 32
        %s256 = scalar_lea.vmem [#allocation3], %s255
        %p257 = pneg %p57
        %p258 = pneg %p54
        %p259 = scmp.lt.s32.totalorder %s26, 1
        %s260 = scalar_select %p259, %s26, 1
        %p261 = scmp.lt.s32.totalorder %s27, 1
        %s262 = scalar_select %p261, %s27, 1
        %s263 = smul.addr %s260, 2
        %s264 = sadd.s32 %s262, %s263
        %s265 = smul.addr %s264, 8
        %s266 = scalar_lea.vmem %s1, %s265
        %p267 = pneg %p85
        %p268 = pneg %p82
        %p269 = pneg %p106
        %p270 = pneg %p103
        %p271 = pneg %p127
        %p272 = pneg %p124
        %p273 = pneg %p148
        %p274 = pneg %p145
        %p275 = pneg %p176
        %p276 = pneg %p173
        %s277 = sand.u32 %s163, 1
        %s278 = scalar_lea.sflag [#allocation5], %s277
        %s279 = sand.u32 %s163, 1
        %s280 = smul.addr %s279, 64
        %s281 = scalar_lea.vmem [#allocation6], %s280
        %s282 = smul.u32 4, %s27
        %p283 = scmp.lt.s32.totalorder %s26, 1
        %s284 = scalar_select %p283, %s26, 1
        %p285 = scmp.lt.s32.totalorder %s27, 1
        %s286 = scalar_select %p285, %s27, 1
        %s287 = smul.addr %s284, 2
        %s288 = sadd.s32 %s286, %s287
        %s289 = smul.addr %s288, 8
        %s290 = scalar_lea.vmem %s1, %s289
        %s291 = smul.u32 4, %s27
        %v292 = vld [vmem:[%s247] sm:$0xff]
        %v293 = vld [vmem:[%s247 + $0x8] sm:$0xff]
        %v294 = vld [vmem:[%s247 + $0x10] sm:$0xff]
        %v295 = vld [vmem:[%s247 + $0x18] sm:$0xff]
        %296 = vst [vmem:[#allocation2 + $0x8] sm:$0xff] %v292
        %297 = vst [vmem:[#allocation2 + $0x10] sm:$0xff] %v293
        %298 = vst [vmem:[#allocation2 + $0x18] sm:$0xff] %v294
        %299 = vst [vmem:[#allocation2 + $0x20] sm:$0xff] %v295
        %v300 = vld [vmem:[%s290] sm:$0xff]
        %302 = vrot.lane.b32.xlu0 %v300, 126
        %v303 = vpop.permute.xlu0 %302
        %vm305 = vcmask 1048560
        %306 = vst.msk [vmem:[#allocation2] sm:$0xff] %vm305, %v303
        %v307 = vld [vmem:[%s290] sm:$0xff]
        %309 = vrot.lane.b32.xlu0 %v307, 126
        %v310 = vpop.permute.xlu0 %309
        %vm312 = vcmask 15360
        %313 = vst.msk [vmem:[#allocation2 + $0x28] sm:$0xff] %vm312, %v310
        %v314 = vld [vmem:[#allocation2] sm:$0xff]
        %v315 = vld [vmem:[#allocation2 + $0x8] sm:$0xff]
        %v316 = vld [vmem:[#allocation2 + $0x10] sm:$0xff]
        %v317 = vld [vmem:[#allocation2 + $0x18] sm:$0xff]
        %v318 = vld [vmem:[#allocation2 + $0x20] sm:$0xff]
        %v319 = vld [vmem:[%s2] sm:$0xff]
        %321 = vset.pattern.permute.xlu0 0
        %322 = vperm.xlu0 %321, %v319
        %v323 = vpop.permute.xlu0 %322
        %v325 = vmul.f32 %v323, %v314
        %v326 = vmul.f32 %v323, %v315
        %v327 = vmul.f32 %v323, %v316
        %v328 = vmul.f32 %v323, %v317
        %v329 = vmul.f32 %v323, %v318
        %v330 = vadd.f32 %v325, 0.0
        %v331 = vadd.f32 %v326, 0.0
        %v332 = vadd.f32 %v327, 0.0
        %v333 = vadd.f32 %v328, 0.0
        %v334 = vadd.f32 %v329, 0.0
        %335 = vset.pattern.permute.xlu0 1
        %336 = vperm.xlu0 %335, %v319
        %v337 = vpop.permute.xlu0 %336
        %v339 = vmul.f32 %v337, %v314
        %v340 = vmul.f32 %v337, %v315
        %v341 = vmul.f32 %v337, %v316
        %v342 = vmul.f32 %v337, %v317
        %v343 = vmul.f32 %v337, %v318
        %349 = vrot.lane.b32.xlu0 %v339, 127
        %v350 = vpop.permute.xlu0 %349
        %351 = vrot.lane.b32.xlu0 %v340, 127
        %v352 = vpop.permute.xlu0 %351
        %353 = vrot.lane.b32.xlu0 %v341, 127
        %v354 = vpop.permute.xlu0 %353
        %355 = vrot.lane.b32.xlu0 %v342, 127
        %v356 = vpop.permute.xlu0 %355
        %357 = vrot.lane.b32.xlu0 %v343, 127
        %v358 = vpop.permute.xlu0 %357
        %vm359 = vcmask 1039360
        %v360 = vsel %vm359, %v350, %v352
        %v361 = vsel %vm359, %v352, %v354
        %v362 = vsel %vm359, %v354, %v356
        %v363 = vsel %vm359, %v356, %v358
        %v369 = vadd.f32 %v330, %v360
        %v370 = vadd.f32 %v331, %v361
        %v371 = vadd.f32 %v332, %v362
        %v372 = vadd.f32 %v333, %v363
        %v373 = vadd.f32 %v334, %v358
        %374 = vset.pattern.permute.xlu0 2
        %375 = vperm.xlu0 %374, %v319
        %v376 = vpop.permute.xlu0 %375
        %v378 = vmul.f32 %v376, %v292
        %v379 = vmul.f32 %v376, %v293
        %v380 = vmul.f32 %v376, %v294
        %v381 = vmul.f32 %v376, %v295
        %386 = vrot.lane.b32.xlu0 %v378, 126
        %v387 = vpop.permute.xlu0 %386
        %388 = vrot.lane.b32.xlu0 %v379, 126
        %v389 = vpop.permute.xlu0 %388
        %390 = vrot.lane.b32.xlu0 %v380, 126
        %v391 = vpop.permute.xlu0 %390
        %392 = vrot.lane.b32.xlu0 %v381, 126
        %v393 = vpop.permute.xlu0 %392
        %vm394 = vcmask 1031168
        %v395 = vsel %vm394, %v387, %v389
        %v396 = vsel %vm394, %v389, %v391
        %v397 = vsel %vm394, %v391, %v393
        %v403 = vadd.f32 %v369, %v387
        %v404 = vadd.f32 %v370, %v395
        %v405 = vadd.f32 %v371, %v396
        %v406 = vadd.f32 %v372, %v397
        %v407 = vadd.f32 %v373, %v393
        %v408 = vld [vmem:[#allocation2 + $0x8] sm:$0xff]
        %v409 = vld [vmem:[#allocation2 + $0x10] sm:$0xff]
        %v410 = vld [vmem:[#allocation2 + $0x18] sm:$0xff]
        %v411 = vld [vmem:[#allocation2 + $0x20] sm:$0xff]
        %v412 = vld [vmem:[#allocation2 + $0x28] sm:$0xff]
        %413 = vset.pattern.permute.xlu0 3
        %414 = vperm.xlu0 %413, %v319
        %v415 = vpop.permute.xlu0 %414
        %v417 = vmul.f32 %v415, %v408
        %v418 = vmul.f32 %v415, %v409
        %v419 = vmul.f32 %v415, %v410
        %v420 = vmul.f32 %v415, %v411
        %v421 = vmul.f32 %v415, %v412
        %427 = vrot.lane.b32.xlu0 %v417, 125
        %v428 = vpop.permute.xlu0 %427
        %429 = vrot.lane.b32.xlu0 %v418, 125
        %v430 = vpop.permute.xlu0 %429
        %431 = vrot.lane.b32.xlu0 %v419, 125
        %v432 = vpop.permute.xlu0 %431
        %433 = vrot.lane.b32.xlu0 %v420, 125
        %v434 = vpop.permute.xlu0 %433
        %435 = vrot.lane.b32.xlu0 %v421, 125
        %v436 = vpop.permute.xlu0 %435
        %vm437 = vcmask 1022976
        %v438 = vsel %vm437, %v428, %v430
        %v439 = vsel %vm437, %v430, %v432
        %v440 = vsel %vm437, %v432, %v434
        %v441 = vsel %vm437, %v434, %v436
        %v447 = vadd.f32 %v403, %v428
        %v448 = vadd.f32 %v404, %v438
        %v449 = vadd.f32 %v405, %v439
        %v450 = vadd.f32 %v406, %v440
        %v451 = vadd.f32 %v407, %v441
        %452 = vset.pattern.permute.xlu0 4
        %453 = vperm.xlu0 %452, %v319
        %v454 = vpop.permute.xlu0 %453
        %v456 = vmul.f32 %v454, %v408
        %v457 = vmul.f32 %v454, %v409
        %v458 = vmul.f32 %v454, %v410
        %v459 = vmul.f32 %v454, %v411
        %v460 = vmul.f32 %v454, %v412
        %466 = vrot.lane.b32.xlu0 %v456, 124
        %v467 = vpop.permute.xlu0 %466
        %468 = vrot.lane.b32.xlu0 %v457, 124
        %v469 = vpop.permute.xlu0 %468
        %470 = vrot.lane.b32.xlu0 %v458, 124
        %v471 = vpop.permute.xlu0 %470
        %472 = vrot.lane.b32.xlu0 %v459, 124
        %v473 = vpop.permute.xlu0 %472
        %474 = vrot.lane.b32.xlu0 %v460, 124
        %v475 = vpop.permute.xlu0 %474
        %vm476 = vcmask 1014784
        %v477 = vsel %vm476, %v467, %v469
        %v478 = vsel %vm476, %v469, %v471
        %v479 = vsel %vm476, %v471, %v473
        %v480 = vsel %vm476, %v473, %v475
        %v486 = vadd.f32 %v447, %v467
        %v487 = vadd.f32 %v448, %v477
        %v488 = vadd.f32 %v449, %v478
        %v489 = vadd.f32 %v450, %v479
        %v490 = vadd.f32 %v451, %v480
        %v491 = vld [vmem:[%s3] sm:$0xff]
        %v492 = vld [vmem:[%s3 + $0x8] sm:$0xff]
        %v493 = vld [vmem:[%s4] sm:$0xff]
        %v494 = vld [vmem:[%s4 + $0x8] sm:$0xff]
        %496 = vset.pattern.permute.xlu0 0
        %497 = vperm.xlu0 %496, %v493
        %v498 = vpop.permute.xlu0 %497
        %501 = vset.pattern.permute.xlu0 0
        %502 = vperm.xlu0 %501, %v494
        %v503 = vpop.permute.xlu0 %502
        %510 = vrot.lane.b32.xlu0 %v486, 2
        %v511 = vpop.permute.xlu0 %510
        %512 = vrot.lane.b32.xlu0 %v487, 2
        %v513 = vpop.permute.xlu0 %512
        %514 = vrot.lane.b32.xlu0 %v488, 2
        %v515 = vpop.permute.xlu0 %514
        %516 = vrot.lane.b32.xlu0 %v489, 2
        %v517 = vpop.permute.xlu0 %516
        %518 = vrot.lane.b32.xlu0 %v490, 2
        %v519 = vpop.permute.xlu0 %518
        %v520 = vsel %vm312, %v511, %v513
        %v521 = vsel %vm312, %v513, %v515
        %v522 = vsel %vm312, %v515, %v517
        %v523 = vsel %vm312, %v517, %v519
        %vm528 = vcmask 64512
        %v530 = vsel %vm528, %v491, 0
        %v533 = vsel %vm528, %v492, 0
        %535 = vmatprep.subr.mxu0 %v521
        %536 = vmatpush1.msra.mxu0 %v520
        %537 = vmatprep.subr.mxu0 0.0
        %538 = vmatpush1.msra.mxu0 0.0
        %539 = vmatprep.subr.mxu0 0.0
        %540 = vmatpush1.msra.mxu0 0.0
        %541 = vmatprep.subr.mxu0 0.0
        %542 = vmatpush1.msra.mxu0 0.0
        %543 = vmatprep.subr.mxu0 0.0
        %544 = vmatpush1.msra.mxu0 0.0
        %545 = vmatprep.subr.mxu0 0.0
        %546 = vmatpush1.msra.mxu0 0.0
        %547 = vmatprep.subr.mxu0 0.0
        %548 = vmatpush1.msra.mxu0 0.0
        %549 = vmatprep.subr.mxu0 0.0
        %550 = vmatpush1.msra.mxu0 0.0
        %551 = vmatprep.subr.mxu0 0.0
        %552 = vmatpush1.msra.mxu0 0.0
        %553 = vmatprep.subr.mxu0 0.0
        %554 = vmatpush1.msra.mxu0 0.0
        %555 = vmatprep.subr.mxu0 0.0
        %556 = vmatpush1.msra.mxu0 0.0
        %557 = vmatprep.subr.mxu0 0.0
        %558 = vmatpush1.msra.mxu0 0.0
        %559 = vmatprep.subr.mxu0 0.0
        %560 = vmatpush1.msra.mxu0 0.0
        %561 = vmatprep.subr.mxu0 0.0
        %562 = vmatpush1.msra.mxu0 0.0
        %563 = vmatprep.subr.mxu0 0.0
        %564 = vmatpush1.msra.mxu0 0.0
        %565 = vmatprep.subr.mxu0 0.0
        %566 = vmatpush1.msra.mxu0 0.0
        %567 = vmatprep.subr.mxu0 0.0
        %568 = vmatpush1.msra.mxu0 0.0
        %569 = vmatprep.subr.mxu0 0.0
        %570 = vmatpush1.msra.mxu0 0.0
        %571 = vmatprep.subr.mxu0 0.0
        %572 = vmatpush1.msra.mxu0 0.0
        %573 = vmatprep.subr.mxu0 0.0
        %574 = vmatpush1.msra.mxu0 0.0
        %575 = vmatprep.subr.mxu0 0.0
        %576 = vmatpush1.msra.mxu0 0.0
        %577 = vmatprep.subr.mxu0 0.0
        %578 = vmatpush1.msra.mxu0 0.0
        %579 = vmatprep.subr.mxu0 0.0
        %580 = vmatpush1.msra.mxu0 0.0
        %581 = vmatprep.subr.mxu0 0.0
        %582 = vmatpush1.msra.mxu0 0.0
        %583 = vmatprep.subr.mxu0 0.0
        %584 = vmatpush1.msra.mxu0 0.0
        %585 = vmatprep.subr.mxu0 0.0
        %586 = vmatpush1.msra.mxu0 0.0
        %587 = vmatprep.subr.mxu0 0.0
        %588 = vmatpush1.msra.mxu0 0.0
        %589 = vmatprep.subr.mxu0 0.0
        %590 = vmatpush1.msra.mxu0 0.0
        %591 = vmatprep.subr.mxu0 0.0
        %592 = vmatpush1.msra.mxu0 0.0
        %593 = vmatprep.subr.mxu0 0.0
        %594 = vmatpush1.msra.mxu0 0.0
        %595 = vmatprep.subr.mxu0 0.0
        %596 = vmatpush1.msra.mxu0 0.0
        %597 = vmatprep.subr.mxu0 0.0
        %598 = vmatpush1.msra.mxu0 0.0
        %599 = vmatprep.mubr.f32.mxu0 0.0
        %600 = vmatmul.mubr.f32.gmra.mrb[0].mxu0 %v530
        %v601 = vpop.f32.mrb[0].mxu0
        %v602 = vadd.f32 %v498, %v601
        %v603 = vpop.f32.mrb[0].mxu0
        %v604 = vadd.f32 %v498, %v603
        %605 = vmatprep.mubr.f32.mxu0 0.0
        %606 = vmatmul.mubr.f32.gmra.mrb[0].mxu0 %v533
        %v607 = vpop.f32.mrb[0].mxu0
        %v608 = vadd.f32 %v503, %v607
        %v609 = vpop.f32.mrb[0].mxu0
        %v610 = vadd.f32 %v503, %v609
        %611 = vdwg.mxu0
        %612 = vmatprep.subr.mxu0 %v523
        %613 = vmatpush1.msra.mxu0 %v522
        %614 = vmatprep.subr.mxu0 0.0
        %615 = vmatpush1.msra.mxu0 0.0
        %616 = vmatprep.subr.mxu0 0.0
        %617 = vmatpush1.msra.mxu0 0.0
        %618 = vmatprep.subr.mxu0 0.0
        %619 = vmatpush1.msra.mxu0 0.0
        %620 = vmatprep.subr.mxu0 0.0
        %621 = vmatpush1.msra.mxu0 0.0
        %622 = vmatprep.subr.mxu0 0.0
        %623 = vmatpush1.msra.mxu0 0.0
        %624 = vmatprep.subr.mxu0 0.0
        %625 = vmatpush1.msra.mxu0 0.0
        %626 = vmatprep.subr.mxu0 0.0
        %627 = vmatpush1.msra.mxu0 0.0
        %628 = vmatprep.subr.mxu0 0.0
        %629 = vmatpush1.msra.mxu0 0.0
        %630 = vmatprep.subr.mxu0 0.0
        %631 = vmatpush1.msra.mxu0 0.0
        %632 = vmatprep.subr.mxu0 0.0
        %633 = vmatpush1.msra.mxu0 0.0
        %634 = vmatprep.subr.mxu0 0.0
        %635 = vmatpush1.msra.mxu0 0.0
        %636 = vmatprep.subr.mxu0 0.0
        %637 = vmatpush1.msra.mxu0 0.0
        %638 = vmatprep.subr.mxu0 0.0
        %639 = vmatpush1.msra.mxu0 0.0
        %640 = vmatprep.subr.mxu0 0.0
        %641 = vmatpush1.msra.mxu0 0.0
        %642 = vmatprep.subr.mxu0 0.0
        %643 = vmatpush1.msra.mxu0 0.0
        %644 = vmatprep.subr.mxu0 0.0
        %645 = vmatpush1.msra.mxu0 0.0
        %646 = vmatprep.subr.mxu0 0.0
        %647 = vmatpush1.msra.mxu0 0.0
        %648 = vmatprep.subr.mxu0 0.0
        %649 = vmatpush1.msra.mxu0 0.0
        %650 = vmatprep.subr.mxu0 0.0
        %651 = vmatpush1.msra.mxu0 0.0
        %652 = vmatprep.subr.mxu0 0.0
        %653 = vmatpush1.msra.mxu0 0.0
        %654 = vmatprep.subr.mxu0 0.0
        %655 = vmatpush1.msra.mxu0 0.0
        %656 = vmatprep.subr.mxu0 0.0
        %657 = vmatpush1.msra.mxu0 0.0
        %658 = vmatprep.subr.mxu0 0.0
        %659 = vmatpush1.msra.mxu0 0.0
        %660 = vmatprep.subr.mxu0 0.0
        %661 = vmatpush1.msra.mxu0 0.0
        %662 = vmatprep.subr.mxu0 0.0
        %663 = vmatpush1.msra.mxu0 0.0
        %664 = vmatprep.subr.mxu0 0.0
        %665 = vmatpush1.msra.mxu0 0.0
        %666 = vmatprep.subr.mxu0 0.0
        %667 = vmatpush1.msra.mxu0 0.0
        %668 = vmatprep.subr.mxu0 0.0
        %669 = vmatpush1.msra.mxu0 0.0
        %670 = vmatprep.subr.mxu0 0.0
        %671 = vmatpush1.msra.mxu0 0.0
        %672 = vmatprep.subr.mxu0 0.0
        %673 = vmatpush1.msra.mxu0 0.0
        %674 = vmatprep.subr.mxu0 0.0
        %675 = vmatpush1.msra.mxu0 0.0
        %676 = vmatprep.mubr.f32.mxu0 0.0
        %677 = vmatmul.mubr.f32.gmra.mrb[0].mxu0 %v530
        %v678 = vpop.f32.mrb[0].mxu0
        %v679 = vadd.f32 %v498, %v678
        %v680 = vpop.f32.mrb[0].mxu0
        %v681 = vadd.f32 %v498, %v680
        %682 = vmatprep.mubr.f32.mxu0 0.0
        %683 = vmatmul.mubr.f32.gmra.mrb[0].mxu0 %v533
        %v684 = vpop.f32.mrb[0].mxu0
        %v685 = vadd.f32 %v503, %v684
        %v686 = vpop.f32.mrb[0].mxu0
        %v687 = vadd.f32 %v503, %v686
        %688 = vdwg.mxu0
        %689 = vst [vmem:[%s281] sm:$0xff] %v602
        %690 = vst [vmem:[%s281 + $0x8] sm:$0xff] %v604
        %691 = vst [vmem:[%s281 + $0x10] sm:$0xff] %v679
        %692 = vst [vmem:[%s281 + $0x18] sm:$0xff] %v681
        %693 = vst [vmem:[%s281 + $0x20] sm:$0xff] %v608
        %694 = vst [vmem:[%s281 + $0x28] sm:$0xff] %v610
        %695 = vst [vmem:[%s281 + $0x30] sm:$0xff] %v685
        %696 = vst [vmem:[%s281 + $0x38] sm:$0xff] %v687
        %s697 = sand.u32 %s163, 1
        %s698 = scalar_lea.sflag [#allocation5], %s697
        %s699 = sand.u32 %s163, 1
        %s700 = smul.addr %s699, 64
        %s701 = scalar_lea.vmem [#allocation6], %s700
        // Predicated region
        $region45: #{tpu_custom_call.1} parent=39 // pred_check
          %p702 = pneg %p173
        $region46: #{tpu_custom_call.1} parent=39 // pred_check_branch
          %704 = sbr.rel (%p702) target = $region48
        $region47: #{tpu_custom_call.1} parent=39 // pred_region
          %s705 = smul.u32 4, %s27
          %s707 = ssub.s32 1024, 1024
          %708 = vsyncadd %s698, %s707
          %s709 = smul.addr %s26, 16
          %s710 = sadd.s32 %s705, %s709
          %s711 = smul.addr %s710, 128
          %s712 = scalar_lea.hbm %s5, %s711
          %s713 = sshll.u32 %s701, 4
          %s714 = int_to_ptr.vmem [resolvable:$true] %s713
          %719 = dma.vmem_to_hbm [thread:$0]  %s714, 1024, %s712, %s698, 512, 1024, 32
        $region48: #{tpu_custom_call.1} parent=39 // pred_fallthru
          _
      $region40: #{tpu_custom_call.1} parent=5 // pred_fallthru
        _
      %p720 = scmp.le.s32.totalorder 2, %s17
      // Predicated region
      $region49: #{tpu_custom_call.1} parent=5 // pred_check
        %p721 = pneg %p720
      $region50: #{tpu_custom_call.1} parent=5 // pred_check_branch
        %723 = sbr.rel (%p721) target = $region52
      $region51: #{tpu_custom_call.1} parent=5 // pred_region
        %s724 = ssub.s32 %s17, 2
        // Predicated region
        $region53: #{tpu_custom_call.1} parent=51 // pred_check
          %p725 = pneg %p179
        $region54: #{tpu_custom_call.1} parent=51 // pred_check_branch
          %727 = sbr.rel (%p725) target = $region56
        $region55: #{tpu_custom_call.1} parent=51 // pred_region
          %s728 = sand.u32 %s164, 1
          %s729 = scalar_lea.sflag [#allocation5], %s728
          %s730 = sand.u32 %s164, 1
          %s731 = smul.addr %s730, 64
          %s732 = scalar_lea.vmem [#allocation6], %s731
          %733 = dma.done %s729, 1024
        $region56: #{tpu_custom_call.1} parent=51 // pred_fallthru
          _
      $region52: #{tpu_custom_call.1} parent=5 // pred_fallthru
        _
    $region6: #{tpu_custom_call.1} parent=1 // loop_footer
      %s21 = sadd.s32 1, %s17
    $region7: #{tpu_custom_call.1} parent=1 // loop_footer_branch
      %16 = sbr.rel target = $region3
    $region8: #{tpu_custom_call.1} parent=1 // loop_exit
      _
    %734 = vsyncpa [#allocation4], 1
    %s735 = scalar_lea.sflag [#allocation4], 1
    %736 = vsyncpa %s735, 1
    %737 = vsyncpa [#allocation5], 1
    %s738 = scalar_lea.sflag [#allocation5], 1
    %739 = vsyncpa %s738, 1

</llo_original>
